<compile_context>
chip_gen: v7x
topology: tpu7x:2x2x1
jax: 0.10.0
libtpu: 0.0.40
codegen_flags: <defaults>
</compile_context>

<pallas_src>
import functools

import jax
import jax.numpy as jnp
from jax import lax
from jax.experimental import pallas as pl
from jax.experimental.pallas import tpu as pltpu

DELTA = 1.0
ALPHA = 0.01
MAX_VALUE = 150.0
LANES = 128

_TARGET_BLOCK_BYTES = 4 << 20   # per input block (2 inputs -> ~8 MiB streamed per step)
_MAX_BLOCK_BYTES = 8 << 20      # hard cap per input block


def _round_up(x, m):
    return ((x + m - 1) // m) * m


def _tensorcores_per_chip():
    """Best-effort TensorCores-per-chip detection (2 on v7x/megacore parts, else 1)."""
    try:
        info = pltpu.get_tpu_info()
        for name in ("num_cores", "num_tensorcores", "tensorcores_per_chip", "core_count"):
            v = getattr(info, name, None)
            if isinstance(v, int) and v >= 1:
                return int(v)
    except Exception:
        pass
    try:
        kind = jax.devices()[0].device_kind.lower()
        if ("v7" in kind) or ("v4" in kind) or ("v5p" in kind):
            return 2
    except Exception:
        pass
    return 1


def _weighted_huber_vals(pred_f32, label_f32, delta):
    """Per-element label * huber(pred - label). The constant alpha/max_value factor and
    the 1/N of the mean are applied once at the end (scalars)."""
    diff = pred_f32 - label_f32
    adiff = jnp.abs(diff)
    huber = jnp.where(adiff <= delta, 0.5 * diff * diff, delta * (adiff - 0.5 * delta))
    return label_f32 * huber


def _wh_kernel(pred_ref, label_ref, out_ref, *, delta, tile_rows,
               blocks_per_split, total_blocks, n_valid_rows, need_mask):
    c = pl.program_id(0)   # parallel split axis (megacore sharding on multi-TC chips)
    i = pl.program_id(1)   # reduction axis: output block resident across it

    @pl.when(i == 0)
    def _():
        out_ref[...] = jnp.zeros_like(out_ref)

    pred = pred_ref[...].astype(jnp.float32)
    label = label_ref[...].astype(jnp.float32)
    vals = _weighted_huber_vals(pred, label, delta)

    def _accumulate(v):
        # Fold (tile_rows, 128) -> (8, 128) with pure VPU vreg adds (no per-step XLU).
        if tile_rows % 8 != 0:
            pad_r = (-tile_rows) % 8
            v = jnp.concatenate([v, jnp.zeros((pad_r, LANES), jnp.float32)], axis=0)
        out_ref[...] += v.reshape(-1, 8, LANES).sum(axis=0)[None, :, :]

    if need_mask:
        b = c * blocks_per_split + i          # logical (unclamped) block index
        is_edge = b >= total_blocks - 1       # partial last block or phantom block

        @pl.when(jnp.logical_not(is_edge))
        def _():
            _accumulate(vals)                 # interior block: no mask work at all

        @pl.when(is_edge)
        def _():
            # Mask rows past the logical end. Use a (tile_rows, 1) iota and let the
            # compare/select broadcast; keep it a select (0*NaN would poison a multiply).
            row0 = b * tile_rows
            row_ids = row0 + lax.broadcasted_iota(jnp.int32, (tile_rows, 1), 0)
            masked = jnp.where(row_ids < n_valid_rows, vals, 0.0)
            _accumulate(masked)
    else:
        _accumulate(vals)


def linear_weighted_huber_loss(pred, label, delta=DELTA, alpha=ALPHA,
                               max_value=MAX_VALUE, tile_rows=None):
    assert pred.shape == label.shape
    n = pred.size
    # jnp arrays are contiguous; ravel/reshape below is a free view when n % 128 == 0.
    p = jnp.ravel(pred)
    l = jnp.ravel(label)

    itemsize = jnp.dtype(pred.dtype).itemsize
    sub_mult = {4: 8, 2: 16, 1: 32}.get(itemsize, 8)   # sublane tiling per dtype

    n_rows = n // LANES
    n_main = n_rows * LANES

    total = jnp.float32(0.0)

    if n_rows >= sub_mult:
        # No-copy view when n % 128 == 0 (no jnp.pad pass over HBM).
        p2 = p[:n_main].reshape(n_rows, LANES)
        l2 = l[:n_main].reshape(n_rows, LANES)

        # --- Tile size: target ~4 MiB per input block (8 MiB streamed per step). ---
        if tile_rows is None:
            tr_req = max(sub_mult, _TARGET_BLOCK_BYTES // (LANES * itemsize))
        else:
            tr_req = int(tile_rows)
        tr_req = min(tr_req, max(sub_mult, _MAX_BLOCK_BYTES // (LANES * itemsize)))

        tr = min(tr_req, n_rows)
        if tr < n_rows:
            tr = max(sub_mult, (tr // sub_mult) * sub_mult)

        total_blocks = pl.cdiv(n_rows, tr)

        # --- Split only on multi-TC chips; serial grid on v5e/v6e gets nothing from it. ---
        num_cores = _tensorcores_per_chip()
        num_splits = 2 if (num_cores >= 2 and total_blocks >= 2) else 1

        # Prefer an even block count when splitting so neither core gets a phantom block.
        if num_splits == 2 and total_blocks % 2 != 0:
            cand = _round_up(pl.cdiv(n_rows, total_blocks + 1), sub_mult)
            cand = min(cand, tr)
            if cand >= sub_mult and pl.cdiv(n_rows, cand) % 2 == 0:
                tr = cand
                total_blocks = pl.cdiv(n_rows, tr)

        blocks_per_split = pl.cdiv(total_blocks, num_splits)
        phantom = num_splits * blocks_per_split != total_blocks
        need_mask = (n_rows % tr != 0) or phantom

        def in_idx(c, i):
            # Clamp phantom blocks (odd total_blocks split over 2 cores) to a real block;
            # the in-kernel edge-block mask zeroes their contribution.
            return (jnp.minimum(c * blocks_per_split + i, total_blocks - 1), 0)

        kernel = functools.partial(
            _wh_kernel,
            delta=float(delta),
            tile_rows=tr,
            blocks_per_split=blocks_per_split,
            total_blocks=total_blocks,
            n_valid_rows=n_rows,
            need_mask=need_mask,
        )

        # Explicit scoped-VMEM budget: 2 inputs x 2 buffers x block + headroom, so big
        # tiles don't hit v5e's 16 MiB default while staying under v7x's 64 MiB physical.
        block_bytes = tr * LANES * itemsize
        vmem_limit = min(2 * 2 * block_bytes + (16 << 20), 48 << 20)

        out = pl.pallas_call(
            kernel,
            out_shape=jax.ShapeDtypeStruct((num_splits, 8, LANES), jnp.float32),
            grid_spec=pltpu.PrefetchScalarGridSpec(
                num_scalar_prefetch=0,
                grid=(num_splits, blocks_per_split),
                in_specs=[
                    pl.BlockSpec((tr, LANES), in_idx),
                    pl.BlockSpec((tr, LANES), in_idx),
                ],
                out_specs=pl.BlockSpec((1, 8, LANES), lambda c, i: (c, 0, 0)),
            ),
            compiler_params=pltpu.CompilerParams(
                # "parallel" on the leading split axis is the standard megacore sharding
                # path; on single-TC chips num_splits=1 so it is a no-op.
                dimension_semantics=("parallel", "arbitrary"),
                vmem_limit_bytes=int(vmem_limit),
            ),
        )(p2, l2)

        total = total + jnp.sum(out)

        if n_main < n:  # ragged tail (< 128 elements): negligible, plain XLA
            total = total + jnp.sum(_weighted_huber_vals(
                p[n_main:].astype(jnp.float32), l[n_main:].astype(jnp.float32),
                float(delta)))
    else:
        # Tiny-input fast path (< sub_mult*128 elements): grid machinery is pure overhead.
        total = jnp.sum(_weighted_huber_vals(
            p.astype(jnp.float32), l.astype(jnp.float32), float(delta)))

    scale = float(alpha) / float(max_value)
    return (total * scale / float(n)).astype(jnp.float32)


def _reference(pred, label, delta=DELTA, alpha=ALPHA, max_value=MAX_VALUE):
    scaled_target = label / max_value
    weights = alpha * scaled_target
    diff = pred - label
    adiff = jnp.abs(diff)
    huber = jnp.where(adiff <= delta, 0.5 * diff * diff, delta * (adiff - 0.5 * delta))
    return jnp.mean(weights * huber)


if __name__ == "__main__":
    key = jax.random.PRNGKey(0)
    k1, k2 = jax.random.split(key)
    shape = (2, 4, 16, 16)  # NCHW, small
    pred = jax.random.normal(k1, shape, dtype=jnp.float32) * 10.0
    label = jax.random.uniform(k2, shape, dtype=jnp.float32, minval=0.0, maxval=150.0)

    loss = linear_weighted_huber_loss(pred, label)
    loss = jax.block_until_ready(loss)

    ref = _reference(pred, label)
    assert jnp.allclose(loss, ref, rtol=1e-5, atol=1e-6), (loss, ref)
    print("KERNEL_OK")
</pallas_src>

<mosaic_0001>
module attributes {stable_mosaic.version = 11 : i64} {
  func.func @_wh_kernel(%arg0: i32, %arg1: i32, %arg2: memref<16x128xf32, #tpu.memory_space<vmem>>, %arg3: memref<16x128xf32, #tpu.memory_space<vmem>>, %arg4: memref<1x8x128xf32, #tpu.memory_space<vmem>>) attributes {dimension_semantics = [#tpu.dimension_semantics<parallel>, #tpu.dimension_semantics<arbitrary>], iteration_bounds = array<i64: 1, 1>, scalar_prefetch = 0 : i64, scratch_operands = 0 : i64, tpu.core_type = #tpu.core_type<tc>, window_params = [{transform_indices = @transform_0, window_bounds = array<i64: 16, 128>}, {transform_indices = @transform_1, window_bounds = array<i64: 16, 128>}, {transform_indices = @transform_2, window_bounds = array<i64: 1, 8, 128>}]} {
    %c0_i32 = arith.constant 0 : i32
    %0 = arith.cmpi eq, %arg1, %c0_i32 : i32
    %1 = arith.extui %0 : i1 to i32
    %c0_i32_0 = arith.constant 0 : i32
    %2 = arith.cmpi ne, %1, %c0_i32_0 : i32
    scf.if %2 {
      %cst_14 = arith.constant 0.000000e+00 : f32
      %24 = vector.broadcast %cst_14 : f32 to vector<1x8x128xf32>
      %c0_15 = arith.constant 0 : index
      %c0_16 = arith.constant 0 : index
      %c0_17 = arith.constant 0 : index
      %25 = vector.load %arg4[%c0_15, %c0_16, %c0_17] : memref<1x8x128xf32, #tpu.memory_space<vmem>>, vector<1x8x128xf32>
      tpu.vector_store %arg4[%c0_15, %c0_16, %c0_17], %24 {strides = array<i32>} : memref<1x8x128xf32, #tpu.memory_space<vmem>>, vector<1x8x128xf32>,
    } else {
    }
    %c0 = arith.constant 0 : index
    %c0_1 = arith.constant 0 : index
    %3 = vector.load %arg2[%c0, %c0_1] : memref<16x128xf32, #tpu.memory_space<vmem>>, vector<16x128xf32>
    %c0_2 = arith.constant 0 : index
    %c0_3 = arith.constant 0 : index
    %4 = vector.load %arg3[%c0_2, %c0_3] : memref<16x128xf32, #tpu.memory_space<vmem>>, vector<16x128xf32>
    %5 = arith.subf %3, %4 : vector<16x128xf32>
    %6 = math.absf %5 : vector<16x128xf32>
    %cst = arith.constant 1.000000e+00 : f32
    %7 = vector.broadcast %cst : f32 to vector<16x128xf32>
    %8 = arith.cmpf ole, %6, %7 : vector<16x128xf32>
    %cst_4 = arith.constant 5.000000e-01 : f32
    %9 = vector.broadcast %cst_4 : f32 to vector<16x128xf32>
    %10 = arith.mulf %9, %5 : vector<16x128xf32>
    %11 = arith.mulf %10, %5 : vector<16x128xf32>
    %cst_5 = arith.constant 5.000000e-01 : f32
    %12 = vector.broadcast %cst_5 : f32 to vector<16x128xf32>
    %13 = arith.subf %6, %12 : vector<16x128xf32>
    %cst_6 = arith.constant 1.000000e+00 : f32
    %14 = vector.broadcast %cst_6 : f32 to vector<16x128xf32>
    %15 = arith.mulf %14, %13 : vector<16x128xf32>
    %16 = arith.select %8, %11, %15 : vector<16x128xi1>, vector<16x128xf32>
    %17 = arith.mulf %4, %16 : vector<16x128xf32>
    %c0_7 = arith.constant 0 : index
    %c0_8 = arith.constant 0 : index
    %c0_9 = arith.constant 0 : index
    %18 = vector.load %arg4[%c0_7, %c0_8, %c0_9] : memref<1x8x128xf32, #tpu.memory_space<vmem>>, vector<1x8x128xf32>
    %19 = vector.shape_cast %17 : vector<16x128xf32> to vector<2x8x128xf32>
    %cst_10 = arith.constant dense<0.000000e+00> : vector<8x128xf32>
    %20 = vector.multi_reduction <add>, %19, %cst_10 [0] : vector<2x8x128xf32> to vector<8x128xf32>
    %21 = vector.shape_cast %20 : vector<8x128xf32> to vector<1x8x128xf32>
    %22 = arith.addf %18, %21 : vector<1x8x128xf32>
    %c0_11 = arith.constant 0 : index
    %c0_12 = arith.constant 0 : index
    %c0_13 = arith.constant 0 : index
    %23 = vector.load %arg4[%c0_11, %c0_12, %c0_13] : memref<1x8x128xf32, #tpu.memory_space<vmem>>, vector<1x8x128xf32>
    tpu.vector_store %arg4[%c0_11, %c0_12, %c0_13], %22 {strides = array<i32>} : memref<1x8x128xf32, #tpu.memory_space<vmem>>, vector<1x8x128xf32>,
    return
  }
  func.func @transform_0(%arg0: i32, %arg1: i32) -> (i32, i32) {
    %c1_i32 = arith.constant 1 : i32
    %0 = arith.muli %arg0, %c1_i32 : i32
    %1 = arith.addi %0, %arg1 : i32
    %c0_i32 = arith.constant 0 : i32
    %2 = arith.minsi %1, %c0_i32 : i32
    %c0_i32_0 = arith.constant 0 : i32
    %c0_i32_1 = arith.constant 0 : i32
    return %2, %c0_i32_0 : i32, i32
  }
  func.func @transform_1(%arg0: i32, %arg1: i32) -> (i32, i32) {
    %c1_i32 = arith.constant 1 : i32
    %0 = arith.muli %arg0, %c1_i32 : i32
    %1 = arith.addi %0, %arg1 : i32
    %c0_i32 = arith.constant 0 : i32
    %2 = arith.minsi %1, %c0_i32 : i32
    %c0_i32_0 = arith.constant 0 : i32
    %c0_i32_1 = arith.constant 0 : i32
    return %2, %c0_i32_0 : i32, i32
  }
  func.func @transform_2(%arg0: i32, %arg1: i32) -> (i32, i32, i32) {
    %c0_i32 = arith.constant 0 : i32
    %c0_i32_0 = arith.constant 0 : i32
    %c0_i32_1 = arith.constant 0 : i32
    return %arg0, %c0_i32, %c0_i32_0 : i32, i32, i32
  }
}

</mosaic_0001>

<llo_original>
// kernel: tpu_custom_call.1
$region0: #{tpu_custom_call.1}
  #allocation0 [shape = 'u32[]', space=smem, size = 0x4, offset = 0x4, fixed_abs, tag = 'smem constant byte address 0x4 - core index']
  #allocation1 [shape = 'u32[144,128]{1,0:T(1,128)}', space=vmem, size = 0x12000, scoped, tag = 'internal scratch']
  %s0 = inlined_call_operand.hbm [shape: f32[16,128], index: 0, kind: input, shape index: {}]
  %s1 = inlined_call_operand.hbm [shape: f32[16,128], index: 1, kind: input, shape index: {}]
  %s2 = inlined_call_operand.hbm [shape: f32[1,8,128], index: 2, kind: output, shape index: {}]
  %s3 = sld [smem:[#allocation0]]
  $region30: #{tpu_custom_call.1} parent=0
    _
  %s5 = ssub.s32 1, %s3
  %s6 = scalar_select 0, %s5, %s3
  $region1: #{tpu_custom_call.1} parent=0
    #allocation2 [shape = 'u8[8192]{0}', space=vmem, size = 0x2000, scoped, tag = 'input window, operand 0, single buffered']
    #allocation3 [shape = 's32[1]{0}', space=sflag, size = 0x4, scoped, tag = 'scoped memory for tpu_custom_call.1']
    #allocation4 [shape = 's32[1]{0}', space=sflag, size = 0x4, scoped, tag = 'scoped memory for tpu_custom_call.1']
    #allocation5 [shape = 'u8[8192]{0}', space=vmem, size = 0x2000, scoped, tag = 'input window, operand 1, single buffered']
    #allocation6 [shape = 's32[1]{0}', space=sflag, size = 0x4, scoped, tag = 'scoped memory for tpu_custom_call.1']
    #allocation7 [shape = 'u8[4096]{0}', space=vmem, size = 0x1000, scoped, tag = 'output window, operand 0, single buffered']
    %7 = vsyncpa [#allocation3], 0
    %8 = vsyncpa [#allocation6], 0
    %9 = vsyncpa [#allocation4], 0
    // Predicated region
    $region2: #{tpu_custom_call.1} parent=1 // pred_check
      _
    $region3: #{tpu_custom_call.1} parent=1 // pred_check_branch
      %11 = sbr.rel (0) target = $region5
    $region4: #{tpu_custom_call.1} parent=1 // pred_region
      %s12 = sadd.s32 0, 0
      %p13 = scmp.lt.s32.totalorder %s12, 0
      %s14 = scalar_select %p13, %s12, 0
      %s15 = smul.u32 2, %s14
      %s17 = ssub.s32 256, 256
      %18 = vsyncadd [#allocation3], %s17
      %s19 = smul.addr %s15, 128
      %s20 = scalar_lea.hbm %s0, %s19
      %s21 = sshll.u32 [#allocation2], 4
      %s22 = int_to_ptr.vmem [resolvable:$true] %s21
      %27 = dma.hbm_to_vmem [thread:$0]  %s20, 256, %s22, [#allocation3], 128, 128, 8
    $region5: #{tpu_custom_call.1} parent=1 // pred_fallthru
      _
    // Predicated region
    $region6: #{tpu_custom_call.1} parent=1 // pred_check
      _
    $region7: #{tpu_custom_call.1} parent=1 // pred_check_branch
      %29 = sbr.rel (0) target = $region9
    $region8: #{tpu_custom_call.1} parent=1 // pred_region
      %s30 = sadd.s32 0, 0
      %p31 = scmp.lt.s32.totalorder %s30, 0
      %s32 = scalar_select %p31, %s30, 0
      %s33 = smul.u32 2, %s32
      %s35 = ssub.s32 256, 256
      %36 = vsyncadd [#allocation6], %s35
      %s37 = smul.addr %s33, 128
      %s38 = scalar_lea.hbm %s1, %s37
      %s39 = sshll.u32 [#allocation5], 4
      %s40 = int_to_ptr.vmem [resolvable:$true] %s39
      %45 = dma.hbm_to_vmem [thread:$0]  %s38, 256, %s40, [#allocation6], 128, 128, 8
    $region9: #{tpu_custom_call.1} parent=1 // pred_fallthru
      _
    // Predicated region
    $region10: #{tpu_custom_call.1} parent=1 // pred_check
      _
    $region11: #{tpu_custom_call.1} parent=1 // pred_check_branch
      %47 = sbr.rel (0) target = $region13
    $region12: #{tpu_custom_call.1} parent=1 // pred_region
      %48 = dma.done [#allocation3], 256
    $region13: #{tpu_custom_call.1} parent=1 // pred_fallthru
      _
    // Predicated region
    $region14: #{tpu_custom_call.1} parent=1 // pred_check
      _
    $region15: #{tpu_custom_call.1} parent=1 // pred_check_branch
      %50 = sbr.rel (0) target = $region17
    $region16: #{tpu_custom_call.1} parent=1 // pred_region
      %51 = dma.done [#allocation6], 256
    $region17: #{tpu_custom_call.1} parent=1 // pred_fallthru
      _
    %s52 = sadd.s32 0, 0
    %p53 = scmp.lt.s32.totalorder %s52, 0
    %s54 = scalar_select %p53, %s52, 0
    %s55 = smul.u32 2, %s54
    %s56 = sadd.s32 0, 0
    %p57 = scmp.lt.s32.totalorder %s56, 0
    %s58 = scalar_select %p57, %s56, 0
    %s59 = smul.u32 2, %s58
    %p60 = scmp.eq.s32.totalorder 0, 0
    // Predicated region
    $region18: #{tpu_custom_call.1} parent=1 // pred_check
      %p61 = pneg %p60
    $region19: #{tpu_custom_call.1} parent=1 // pred_check_branch
      %63 = sbr.rel (%p61) target = $region21
    $region20: #{tpu_custom_call.1} parent=1 // pred_region
      %64 = vst [vmem:[#allocation7] sm:$0xff] 0.0
    $region21: #{tpu_custom_call.1} parent=1 // pred_fallthru
      _
    %v65 = vld [vmem:[#allocation2] sm:$0xff]
    %v66 = vld [vmem:[#allocation2 + $0x8] sm:$0xff]
    %v67 = vld [vmem:[#allocation5] sm:$0xff]
    %v68 = vld [vmem:[#allocation5 + $0x8] sm:$0xff]
    %v69 = vsub.f32 %v65, %v67
    %v70 = vsub.f32 %v66, %v68
    %v71 = vand.u32 2147483647, %v69
    %v72 = vand.u32 2147483647, %v70
    %vm73 = vcmp.le.f32.partialorder %v71, 1.0
    %vm74 = vcmp.le.f32.partialorder %v72, 1.0
    %v75 = vmul.f32 %v69, 0.5
    %v76 = vmul.f32 %v70, 0.5
    %v77 = vmul.f32 %v75, %v69
    %v78 = vmul.f32 %v76, %v70
    %v79 = vsub.f32 %v71, 0.5
    %v80 = vsub.f32 %v72, 0.5
    %v81 = vsel %vm73, %v77, %v79
    %v82 = vsel %vm74, %v78, %v80
    %v83 = vmul.f32 %v67, %v81
    %v84 = vmul.f32 %v68, %v82
    %v85 = vld [vmem:[#allocation7] sm:$0xff]
    %v86 = vadd.f32 %v83, %v84
    %v87 = vadd.f32 %v85, %v86
    %88 = vst [vmem:[#allocation7] sm:$0xff] %v87
    // Predicated region
    $region22: #{tpu_custom_call.1} parent=1 // pred_check
      _
    $region23: #{tpu_custom_call.1} parent=1 // pred_check_branch
      %90 = sbr.rel (0) target = $region25
    $region24: #{tpu_custom_call.1} parent=1 // pred_region
      %s92 = ssub.s32 128, 128
      %93 = vsyncadd [#allocation4], %s92
      %s95 = sshll.u32 [#allocation7], 4
      %s96 = int_to_ptr.vmem [resolvable:$true] %s95
      %98 = dma.vmem_to_hbm [thread:$0]  %s96, 128, %s2, [#allocation4]
    $region25: #{tpu_custom_call.1} parent=1 // pred_fallthru
      _
    // Predicated region
    $region26: #{tpu_custom_call.1} parent=1 // pred_check
      _
    $region27: #{tpu_custom_call.1} parent=1 // pred_check_branch
      %100 = sbr.rel (0) target = $region29
    $region28: #{tpu_custom_call.1} parent=1 // pred_region
      %101 = dma.done [#allocation4], 128
    $region29: #{tpu_custom_call.1} parent=1 // pred_fallthru
      _
    %102 = vsyncpa [#allocation3], 1
    %103 = vsyncpa [#allocation6], 1
    %104 = vsyncpa [#allocation4], 1

</llo_original>
